<compile_context>
chip_gen: v5e
topology: v5e:2x2
jax: 0.10.0
libtpu: 0.0.40
codegen_flags: <defaults>
</compile_context>

<pallas_src>
import functools
import math

import jax
import jax.numpy as jnp
from jax.experimental import pallas as pl
from jax.experimental.pallas import tpu as pltpu


def _embed_gather_kernel(ids_ref, table_hbm, out_ref, rows_vmem, copy_sems,
                         *, scale, vocab_size):
    # ids_ref:   (T_pad,) int32 in SMEM (scalar prefetch)
    # table_hbm: (V, D)   float in HBM (pl.ANY) -- manual DMA only
    # out_ref:   (tile, D) VMEM output block
    # rows_vmem: (tile, D) VMEM scratch (gather destination)
    # copy_sems: (tile,)   DMA semaphores (one per in-flight row copy)
    tile = out_ref.shape[0]
    base = pl.program_id(0) * tile
    unroll = tile <= 64  # static: fully unroll small tiles for LLO visibility

    # Start every row DMA before waiting on any -> `tile` copies in flight.
    @pl.loop(0, tile, unroll=unroll)
    def _issue(j):
        tok = ids_ref[base + j]
        # Clamp padded / untrusted ids so the row DMA never reads outside the
        # HBM table (PyTorch nn.Embedding would raise on out-of-range ids).
        tok = jnp.clip(tok, 0, vocab_size - 1)
        pltpu.make_async_copy(
            table_hbm.at[pl.ds(tok, 1), :],
            rows_vmem.at[pl.ds(j, 1), :],
            copy_sems.at[j],
        ).start()

    @pl.loop(0, tile, unroll=unroll)
    def _wait(j):
        pltpu.make_async_copy(
            table_hbm.at[pl.ds(0, 1), :],     # placeholder src; wait on sem j
            rows_vmem.at[pl.ds(j, 1), :],
            copy_sems.at[j],
        ).wait()

    # Fused scale; hidden under the next tile's DMA traffic.
    out_ref[...] = rows_vmem[...] * scale


def input_embeddings(x, table, *, token_tile=256):
    """x: (B, S) int token ids; table: (V, D) float. Returns (B, S, D)."""
    B, S = x.shape
    V, D = table.shape
    T = B * S
    scale = math.sqrt(D)

    ids = x.reshape(T).astype(jnp.int32)

    # Token tile: multiple of 8 (f32 sublane), capped by token_tile. Pad the
    # id list up to a whole number of tiles (padded rows are sliced off).
    tile = min(token_tile, ((T + 7) // 8) * 8)
    t_pad = pl.cdiv(T, tile) * tile
    if t_pad != T:
        ids = jnp.pad(ids, (0, t_pad - T))

    kernel = functools.partial(_embed_gather_kernel, scale=scale, vocab_size=V)

    out_flat = pl.pallas_call(
        kernel,
        out_shape=jax.ShapeDtypeStruct((t_pad, D), table.dtype),
        grid_spec=pltpu.PrefetchScalarGridSpec(
            num_scalar_prefetch=1,                      # ids -> SMEM
            grid=(t_pad // tile,),
            in_specs=[
                pl.BlockSpec(memory_space=pl.ANY),      # table stays in HBM
            ],
            out_specs=pl.BlockSpec((tile, D), lambda i, ids: (i, 0)),
            scratch_shapes=[
                pltpu.VMEM((tile, D), table.dtype),
                pltpu.SemaphoreType.DMA((tile,)),
            ],
        ),
        compiler_params=pltpu.CompilerParams(
            dimension_semantics=("parallel",),
        ),
    )(ids, table)

    return out_flat[:T].reshape(B, S, D)


if __name__ == "__main__":
    # Small demo shapes consistent with the module: d_model=128 (lane-dense
    # last dim), vocab_size=512, batch=2, seq=8.
    d_model = 128
    vocab_size = 512
    B, S = 2, 8

    key = jax.random.PRNGKey(0)
    k_tab, k_ids = jax.random.split(key)

    # nn.Embedding default init: weight ~ N(0, 1)
    table = jax.random.normal(k_tab, (vocab_size, d_model), dtype=jnp.float32)
    x = jax.random.randint(k_ids, (B, S), 0, vocab_size, dtype=jnp.int32)

    # token_tile=8 just so the tiny demo exercises a multi-step (pipelined) grid.
    out = input_embeddings(x, table, token_tile=8)
    out = jax.block_until_ready(out)

    # Reference check (plain JAX).
    ref = table[x] * jnp.float32(math.sqrt(d_model))
    assert out.shape == (B, S, d_model), out.shape
    assert jnp.allclose(out, ref, atol=1e-5, rtol=1e-5), "mismatch vs reference"

    print("KERNEL_OK")
</pallas_src>

<mosaic_0001>
module attributes {stable_mosaic.version = 11 : i64} {
  func.func @_embed_gather_kernel(%arg0: i32, %arg1: memref<16xi32, #tpu.memory_space<smem>>, %arg2: memref<512x128xf32, #tpu.memory_space<any>>, %arg3: memref<8x128xf32, #tpu.memory_space<vmem>>, %arg4: memref<8x128xf32, #tpu.memory_space<vmem>>, %arg5: memref<8x!tpu.dma_semaphore, #tpu.memory_space<semaphore_mem>>) attributes {dimension_semantics = [#tpu.dimension_semantics<parallel>], iteration_bounds = array<i64: 2>, scalar_prefetch = 1 : i64, scratch_operands = 2 : i64, tpu.core_type = #tpu.core_type<tc>, window_params = [{}, {transform_indices = @transform_1, window_bounds = array<i64: 8, 128>}]} {
    %c8_i32 = arith.constant 8 : i32
    %0 = arith.muli %arg0, %c8_i32 : i32
    %c0_i32 = arith.constant 0 : i32
    %c1_i32 = arith.constant 1 : i32
    %1 = arith.muli %c0_i32, %c1_i32 : i32
    %c0_i32_0 = arith.constant 0 : i32
    %2 = arith.addi %c0_i32_0, %1 : i32
    %3 = arith.addi %0, %2 : i32
    %4 = arith.index_cast %3 : i32 to index
    %5 = memref.load %arg1[%4] : memref<16xi32, #tpu.memory_space<smem>>
    %c0_i32_1 = arith.constant 0 : i32
    %c511_i32 = arith.constant 511 : i32
    %6 = arith.maxsi %c0_i32_1, %5 : i32
    %7 = arith.minsi %c511_i32, %6 : i32
    %c0_i32_2 = arith.constant 0 : i32
    %8 = tpu.memref_slice %arg2[%7, %c0_i32_2] : memref<512x128xf32, #tpu.memory_space<any>> -> memref<1x128xf32, #tpu.memory_space<any>>
    %c0_i32_3 = arith.constant 0 : i32
    %9 = tpu.memref_slice %arg4[%2, %c0_i32_3] : memref<8x128xf32, #tpu.memory_space<vmem>> -> memref<1x128xf32, #tpu.memory_space<vmem>>
    %10 = tpu.memref_slice %arg5[%2] : memref<8x!tpu.dma_semaphore, #tpu.memory_space<semaphore_mem>> -> memref<1x!tpu.dma_semaphore, #tpu.memory_space<semaphore_mem>>
    %11 = tpu.memref_squeeze %10 : memref<1x!tpu.dma_semaphore, #tpu.memory_space<semaphore_mem>> -> memref<!tpu.dma_semaphore, #tpu.memory_space<semaphore_mem>>
    tpu.enqueue_dma source(%8 : memref<1x128xf32, #tpu.memory_space<any>>) target(%9 : memref<1x128xf32, #tpu.memory_space<vmem>>) target_semaphore(%11 : memref<!tpu.dma_semaphore, #tpu.memory_space<semaphore_mem>>)
    %c1_i32_4 = arith.constant 1 : i32
    %c1_i32_5 = arith.constant 1 : i32
    %12 = arith.muli %c1_i32_4, %c1_i32_5 : i32
    %c0_i32_6 = arith.constant 0 : i32
    %13 = arith.addi %c0_i32_6, %12 : i32
    %14 = arith.addi %0, %13 : i32
    %15 = arith.index_cast %14 : i32 to index
    %16 = memref.load %arg1[%15] : memref<16xi32, #tpu.memory_space<smem>>
    %c0_i32_7 = arith.constant 0 : i32
    %c511_i32_8 = arith.constant 511 : i32
    %17 = arith.maxsi %c0_i32_7, %16 : i32
    %18 = arith.minsi %c511_i32_8, %17 : i32
    %c0_i32_9 = arith.constant 0 : i32
    %19 = tpu.memref_slice %arg2[%18, %c0_i32_9] : memref<512x128xf32, #tpu.memory_space<any>> -> memref<1x128xf32, #tpu.memory_space<any>>
    %c0_i32_10 = arith.constant 0 : i32
    %20 = tpu.memref_slice %arg4[%13, %c0_i32_10] : memref<8x128xf32, #tpu.memory_space<vmem>> -> memref<1x128xf32, #tpu.memory_space<vmem>>
    %21 = tpu.memref_slice %arg5[%13] : memref<8x!tpu.dma_semaphore, #tpu.memory_space<semaphore_mem>> -> memref<1x!tpu.dma_semaphore, #tpu.memory_space<semaphore_mem>>
    %22 = tpu.memref_squeeze %21 : memref<1x!tpu.dma_semaphore, #tpu.memory_space<semaphore_mem>> -> memref<!tpu.dma_semaphore, #tpu.memory_space<semaphore_mem>>
    tpu.enqueue_dma source(%19 : memref<1x128xf32, #tpu.memory_space<any>>) target(%20 : memref<1x128xf32, #tpu.memory_space<vmem>>) target_semaphore(%22 : memref<!tpu.dma_semaphore, #tpu.memory_space<semaphore_mem>>)
    %c2_i32 = arith.constant 2 : i32
    %c1_i32_11 = arith.constant 1 : i32
    %23 = arith.muli %c2_i32, %c1_i32_11 : i32
    %c0_i32_12 = arith.constant 0 : i32
    %24 = arith.addi %c0_i32_12, %23 : i32
    %25 = arith.addi %0, %24 : i32
    %26 = arith.index_cast %25 : i32 to index
    %27 = memref.load %arg1[%26] : memref<16xi32, #tpu.memory_space<smem>>
    %c0_i32_13 = arith.constant 0 : i32
    %c511_i32_14 = arith.constant 511 : i32
    %28 = arith.maxsi %c0_i32_13, %27 : i32
    %29 = arith.minsi %c511_i32_14, %28 : i32
    %c0_i32_15 = arith.constant 0 : i32
    %30 = tpu.memref_slice %arg2[%29, %c0_i32_15] : memref<512x128xf32, #tpu.memory_space<any>> -> memref<1x128xf32, #tpu.memory_space<any>>
    %c0_i32_16 = arith.constant 0 : i32
    %31 = tpu.memref_slice %arg4[%24, %c0_i32_16] : memref<8x128xf32, #tpu.memory_space<vmem>> -> memref<1x128xf32, #tpu.memory_space<vmem>>
    %32 = tpu.memref_slice %arg5[%24] : memref<8x!tpu.dma_semaphore, #tpu.memory_space<semaphore_mem>> -> memref<1x!tpu.dma_semaphore, #tpu.memory_space<semaphore_mem>>
    %33 = tpu.memref_squeeze %32 : memref<1x!tpu.dma_semaphore, #tpu.memory_space<semaphore_mem>> -> memref<!tpu.dma_semaphore, #tpu.memory_space<semaphore_mem>>
    tpu.enqueue_dma source(%30 : memref<1x128xf32, #tpu.memory_space<any>>) target(%31 : memref<1x128xf32, #tpu.memory_space<vmem>>) target_semaphore(%33 : memref<!tpu.dma_semaphore, #tpu.memory_space<semaphore_mem>>)
    %c3_i32 = arith.constant 3 : i32
    %c1_i32_17 = arith.constant 1 : i32
    %34 = arith.muli %c3_i32, %c1_i32_17 : i32
    %c0_i32_18 = arith.constant 0 : i32
    %35 = arith.addi %c0_i32_18, %34 : i32
    %36 = arith.addi %0, %35 : i32
    %37 = arith.index_cast %36 : i32 to index
    %38 = memref.load %arg1[%37] : memref<16xi32, #tpu.memory_space<smem>>
    %c0_i32_19 = arith.constant 0 : i32
    %c511_i32_20 = arith.constant 511 : i32
    %39 = arith.maxsi %c0_i32_19, %38 : i32
    %40 = arith.minsi %c511_i32_20, %39 : i32
    %c0_i32_21 = arith.constant 0 : i32
    %41 = tpu.memref_slice %arg2[%40, %c0_i32_21] : memref<512x128xf32, #tpu.memory_space<any>> -> memref<1x128xf32, #tpu.memory_space<any>>
    %c0_i32_22 = arith.constant 0 : i32
    %42 = tpu.memref_slice %arg4[%35, %c0_i32_22] : memref<8x128xf32, #tpu.memory_space<vmem>> -> memref<1x128xf32, #tpu.memory_space<vmem>>
    %43 = tpu.memref_slice %arg5[%35] : memref<8x!tpu.dma_semaphore, #tpu.memory_space<semaphore_mem>> -> memref<1x!tpu.dma_semaphore, #tpu.memory_space<semaphore_mem>>
    %44 = tpu.memref_squeeze %43 : memref<1x!tpu.dma_semaphore, #tpu.memory_space<semaphore_mem>> -> memref<!tpu.dma_semaphore, #tpu.memory_space<semaphore_mem>>
    tpu.enqueue_dma source(%41 : memref<1x128xf32, #tpu.memory_space<any>>) target(%42 : memref<1x128xf32, #tpu.memory_space<vmem>>) target_semaphore(%44 : memref<!tpu.dma_semaphore, #tpu.memory_space<semaphore_mem>>)
    %c4_i32 = arith.constant 4 : i32
    %c1_i32_23 = arith.constant 1 : i32
    %45 = arith.muli %c4_i32, %c1_i32_23 : i32
    %c0_i32_24 = arith.constant 0 : i32
    %46 = arith.addi %c0_i32_24, %45 : i32
    %47 = arith.addi %0, %46 : i32
    %48 = arith.index_cast %47 : i32 to index
    %49 = memref.load %arg1[%48] : memref<16xi32, #tpu.memory_space<smem>>
    %c0_i32_25 = arith.constant 0 : i32
    %c511_i32_26 = arith.constant 511 : i32
    %50 = arith.maxsi %c0_i32_25, %49 : i32
    %51 = arith.minsi %c511_i32_26, %50 : i32
    %c0_i32_27 = arith.constant 0 : i32
    %52 = tpu.memref_slice %arg2[%51, %c0_i32_27] : memref<512x128xf32, #tpu.memory_space<any>> -> memref<1x128xf32, #tpu.memory_space<any>>
    %c0_i32_28 = arith.constant 0 : i32
    %53 = tpu.memref_slice %arg4[%46, %c0_i32_28] : memref<8x128xf32, #tpu.memory_space<vmem>> -> memref<1x128xf32, #tpu.memory_space<vmem>>
    %54 = tpu.memref_slice %arg5[%46] : memref<8x!tpu.dma_semaphore, #tpu.memory_space<semaphore_mem>> -> memref<1x!tpu.dma_semaphore, #tpu.memory_space<semaphore_mem>>
    %55 = tpu.memref_squeeze %54 : memref<1x!tpu.dma_semaphore, #tpu.memory_space<semaphore_mem>> -> memref<!tpu.dma_semaphore, #tpu.memory_space<semaphore_mem>>
    tpu.enqueue_dma source(%52 : memref<1x128xf32, #tpu.memory_space<any>>) target(%53 : memref<1x128xf32, #tpu.memory_space<vmem>>) target_semaphore(%55 : memref<!tpu.dma_semaphore, #tpu.memory_space<semaphore_mem>>)
    %c5_i32 = arith.constant 5 : i32
    %c1_i32_29 = arith.constant 1 : i32
    %56 = arith.muli %c5_i32, %c1_i32_29 : i32
    %c0_i32_30 = arith.constant 0 : i32
    %57 = arith.addi %c0_i32_30, %56 : i32
    %58 = arith.addi %0, %57 : i32
    %59 = arith.index_cast %58 : i32 to index
    %60 = memref.load %arg1[%59] : memref<16xi32, #tpu.memory_space<smem>>
    %c0_i32_31 = arith.constant 0 : i32
    %c511_i32_32 = arith.constant 511 : i32
    %61 = arith.maxsi %c0_i32_31, %60 : i32
    %62 = arith.minsi %c511_i32_32, %61 : i32
    %c0_i32_33 = arith.constant 0 : i32
    %63 = tpu.memref_slice %arg2[%62, %c0_i32_33] : memref<512x128xf32, #tpu.memory_space<any>> -> memref<1x128xf32, #tpu.memory_space<any>>
    %c0_i32_34 = arith.constant 0 : i32
    %64 = tpu.memref_slice %arg4[%57, %c0_i32_34] : memref<8x128xf32, #tpu.memory_space<vmem>> -> memref<1x128xf32, #tpu.memory_space<vmem>>
    %65 = tpu.memref_slice %arg5[%57] : memref<8x!tpu.dma_semaphore, #tpu.memory_space<semaphore_mem>> -> memref<1x!tpu.dma_semaphore, #tpu.memory_space<semaphore_mem>>
    %66 = tpu.memref_squeeze %65 : memref<1x!tpu.dma_semaphore, #tpu.memory_space<semaphore_mem>> -> memref<!tpu.dma_semaphore, #tpu.memory_space<semaphore_mem>>
    tpu.enqueue_dma source(%63 : memref<1x128xf32, #tpu.memory_space<any>>) target(%64 : memref<1x128xf32, #tpu.memory_space<vmem>>) target_semaphore(%66 : memref<!tpu.dma_semaphore, #tpu.memory_space<semaphore_mem>>)
    %c6_i32 = arith.constant 6 : i32
    %c1_i32_35 = arith.constant 1 : i32
    %67 = arith.muli %c6_i32, %c1_i32_35 : i32
    %c0_i32_36 = arith.constant 0 : i32
    %68 = arith.addi %c0_i32_36, %67 : i32
    %69 = arith.addi %0, %68 : i32
    %70 = arith.index_cast %69 : i32 to index
    %71 = memref.load %arg1[%70] : memref<16xi32, #tpu.memory_space<smem>>
    %c0_i32_37 = arith.constant 0 : i32
    %c511_i32_38 = arith.constant 511 : i32
    %72 = arith.maxsi %c0_i32_37, %71 : i32
    %73 = arith.minsi %c511_i32_38, %72 : i32
    %c0_i32_39 = arith.constant 0 : i32
    %74 = tpu.memref_slice %arg2[%73, %c0_i32_39] : memref<512x128xf32, #tpu.memory_space<any>> -> memref<1x128xf32, #tpu.memory_space<any>>
    %c0_i32_40 = arith.constant 0 : i32
    %75 = tpu.memref_slice %arg4[%68, %c0_i32_40] : memref<8x128xf32, #tpu.memory_space<vmem>> -> memref<1x128xf32, #tpu.memory_space<vmem>>
    %76 = tpu.memref_slice %arg5[%68] : memref<8x!tpu.dma_semaphore, #tpu.memory_space<semaphore_mem>> -> memref<1x!tpu.dma_semaphore, #tpu.memory_space<semaphore_mem>>
    %77 = tpu.memref_squeeze %76 : memref<1x!tpu.dma_semaphore, #tpu.memory_space<semaphore_mem>> -> memref<!tpu.dma_semaphore, #tpu.memory_space<semaphore_mem>>
    tpu.enqueue_dma source(%74 : memref<1x128xf32, #tpu.memory_space<any>>) target(%75 : memref<1x128xf32, #tpu.memory_space<vmem>>) target_semaphore(%77 : memref<!tpu.dma_semaphore, #tpu.memory_space<semaphore_mem>>)
    %c7_i32 = arith.constant 7 : i32
    %c1_i32_41 = arith.constant 1 : i32
    %78 = arith.muli %c7_i32, %c1_i32_41 : i32
    %c0_i32_42 = arith.constant 0 : i32
    %79 = arith.addi %c0_i32_42, %78 : i32
    %80 = arith.addi %0, %79 : i32
    %81 = arith.index_cast %80 : i32 to index
    %82 = memref.load %arg1[%81] : memref<16xi32, #tpu.memory_space<smem>>
    %c0_i32_43 = arith.constant 0 : i32
    %c511_i32_44 = arith.constant 511 : i32
    %83 = arith.maxsi %c0_i32_43, %82 : i32
    %84 = arith.minsi %c511_i32_44, %83 : i32
    %c0_i32_45 = arith.constant 0 : i32
    %85 = tpu.memref_slice %arg2[%84, %c0_i32_45] : memref<512x128xf32, #tpu.memory_space<any>> -> memref<1x128xf32, #tpu.memory_space<any>>
    %c0_i32_46 = arith.constant 0 : i32
    %86 = tpu.memref_slice %arg4[%79, %c0_i32_46] : memref<8x128xf32, #tpu.memory_space<vmem>> -> memref<1x128xf32, #tpu.memory_space<vmem>>
    %87 = tpu.memref_slice %arg5[%79] : memref<8x!tpu.dma_semaphore, #tpu.memory_space<semaphore_mem>> -> memref<1x!tpu.dma_semaphore, #tpu.memory_space<semaphore_mem>>
    %88 = tpu.memref_squeeze %87 : memref<1x!tpu.dma_semaphore, #tpu.memory_space<semaphore_mem>> -> memref<!tpu.dma_semaphore, #tpu.memory_space<semaphore_mem>>
    tpu.enqueue_dma source(%85 : memref<1x128xf32, #tpu.memory_space<any>>) target(%86 : memref<1x128xf32, #tpu.memory_space<vmem>>) target_semaphore(%88 : memref<!tpu.dma_semaphore, #tpu.memory_space<semaphore_mem>>)
    %c8_i32_47 = arith.constant 8 : i32
    %c0_i32_48 = arith.constant 0 : i32
    %c1_i32_49 = arith.constant 1 : i32
    %89 = arith.muli %c0_i32_48, %c1_i32_49 : i32
    %c0_i32_50 = arith.constant 0 : i32
    %90 = arith.addi %c0_i32_50, %89 : i32
    %c0_i32_51 = arith.constant 0 : i32
    %c0_i32_52 = arith.constant 0 : i32
    %91 = tpu.memref_slice %arg2[%c0_i32_51, %c0_i32_52] : memref<512x128xf32, #tpu.memory_space<any>> -> memref<1x128xf32, #tpu.memory_space<any>>
    %c0_i32_53 = arith.constant 0 : i32
    %92 = tpu.memref_slice %arg4[%90, %c0_i32_53] : memref<8x128xf32, #tpu.memory_space<vmem>> -> memref<1x128xf32, #tpu.memory_space<vmem>>
    %93 = tpu.memref_slice %arg5[%90] : memref<8x!tpu.dma_semaphore, #tpu.memory_space<semaphore_mem>> -> memref<1x!tpu.dma_semaphore, #tpu.memory_space<semaphore_mem>>
    %94 = tpu.memref_squeeze %93 : memref<1x!tpu.dma_semaphore, #tpu.memory_space<semaphore_mem>> -> memref<!tpu.dma_semaphore, #tpu.memory_space<semaphore_mem>>
    tpu.wait_dma2 semaphore(%94 : memref<!tpu.dma_semaphore, #tpu.memory_space<semaphore_mem>>) src(%91 : memref<1x128xf32, #tpu.memory_space<any>>) dst(%92 : memref<1x128xf32, #tpu.memory_space<vmem>>)
    %c1_i32_54 = arith.constant 1 : i32
    %c1_i32_55 = arith.constant 1 : i32
    %95 = arith.muli %c1_i32_54, %c1_i32_55 : i32
    %c0_i32_56 = arith.constant 0 : i32
    %96 = arith.addi %c0_i32_56, %95 : i32
    %c0_i32_57 = arith.constant 0 : i32
    %c0_i32_58 = arith.constant 0 : i32
    %97 = tpu.memref_slice %arg2[%c0_i32_57, %c0_i32_58] : memref<512x128xf32, #tpu.memory_space<any>> -> memref<1x128xf32, #tpu.memory_space<any>>
    %c0_i32_59 = arith.constant 0 : i32
    %98 = tpu.memref_slice %arg4[%96, %c0_i32_59] : memref<8x128xf32, #tpu.memory_space<vmem>> -> memref<1x128xf32, #tpu.memory_space<vmem>>
    %99 = tpu.memref_slice %arg5[%96] : memref<8x!tpu.dma_semaphore, #tpu.memory_space<semaphore_mem>> -> memref<1x!tpu.dma_semaphore, #tpu.memory_space<semaphore_mem>>
    %100 = tpu.memref_squeeze %99 : memref<1x!tpu.dma_semaphore, #tpu.memory_space<semaphore_mem>> -> memref<!tpu.dma_semaphore, #tpu.memory_space<semaphore_mem>>
    tpu.wait_dma2 semaphore(%100 : memref<!tpu.dma_semaphore, #tpu.memory_space<semaphore_mem>>) src(%97 : memref<1x128xf32, #tpu.memory_space<any>>) dst(%98 : memref<1x128xf32, #tpu.memory_space<vmem>>)
    %c2_i32_60 = arith.constant 2 : i32
    %c1_i32_61 = arith.constant 1 : i32
    %101 = arith.muli %c2_i32_60, %c1_i32_61 : i32
    %c0_i32_62 = arith.constant 0 : i32
    %102 = arith.addi %c0_i32_62, %101 : i32
    %c0_i32_63 = arith.constant 0 : i32
    %c0_i32_64 = arith.constant 0 : i32
    %103 = tpu.memref_slice %arg2[%c0_i32_63, %c0_i32_64] : memref<512x128xf32, #tpu.memory_space<any>> -> memref<1x128xf32, #tpu.memory_space<any>>
    %c0_i32_65 = arith.constant 0 : i32
    %104 = tpu.memref_slice %arg4[%102, %c0_i32_65] : memref<8x128xf32, #tpu.memory_space<vmem>> -> memref<1x128xf32, #tpu.memory_space<vmem>>
    %105 = tpu.memref_slice %arg5[%102] : memref<8x!tpu.dma_semaphore, #tpu.memory_space<semaphore_mem>> -> memref<1x!tpu.dma_semaphore, #tpu.memory_space<semaphore_mem>>
    %106 = tpu.memref_squeeze %105 : memref<1x!tpu.dma_semaphore, #tpu.memory_space<semaphore_mem>> -> memref<!tpu.dma_semaphore, #tpu.memory_space<semaphore_mem>>
    tpu.wait_dma2 semaphore(%106 : memref<!tpu.dma_semaphore, #tpu.memory_space<semaphore_mem>>) src(%103 : memref<1x128xf32, #tpu.memory_space<any>>) dst(%104 : memref<1x128xf32, #tpu.memory_space<vmem>>)
    %c3_i32_66 = arith.constant 3 : i32
    %c1_i32_67 = arith.constant 1 : i32
    %107 = arith.muli %c3_i32_66, %c1_i32_67 : i32
    %c0_i32_68 = arith.constant 0 : i32
    %108 = arith.addi %c0_i32_68, %107 : i32
    %c0_i32_69 = arith.constant 0 : i32
    %c0_i32_70 = arith.constant 0 : i32
    %109 = tpu.memref_slice %arg2[%c0_i32_69, %c0_i32_70] : memref<512x128xf32, #tpu.memory_space<any>> -> memref<1x128xf32, #tpu.memory_space<any>>
    %c0_i32_71 = arith.constant 0 : i32
    %110 = tpu.memref_slice %arg4[%108, %c0_i32_71] : memref<8x128xf32, #tpu.memory_space<vmem>> -> memref<1x128xf32, #tpu.memory_space<vmem>>
    %111 = tpu.memref_slice %arg5[%108] : memref<8x!tpu.dma_semaphore, #tpu.memory_space<semaphore_mem>> -> memref<1x!tpu.dma_semaphore, #tpu.memory_space<semaphore_mem>>
    %112 = tpu.memref_squeeze %111 : memref<1x!tpu.dma_semaphore, #tpu.memory_space<semaphore_mem>> -> memref<!tpu.dma_semaphore, #tpu.memory_space<semaphore_mem>>
    tpu.wait_dma2 semaphore(%112 : memref<!tpu.dma_semaphore, #tpu.memory_space<semaphore_mem>>) src(%109 : memref<1x128xf32, #tpu.memory_space<any>>) dst(%110 : memref<1x128xf32, #tpu.memory_space<vmem>>)
    %c4_i32_72 = arith.constant 4 : i32
    %c1_i32_73 = arith.constant 1 : i32
    %113 = arith.muli %c4_i32_72, %c1_i32_73 : i32
    %c0_i32_74 = arith.constant 0 : i32
    %114 = arith.addi %c0_i32_74, %113 : i32
    %c0_i32_75 = arith.constant 0 : i32
    %c0_i32_76 = arith.constant 0 : i32
    %115 = tpu.memref_slice %arg2[%c0_i32_75, %c0_i32_76] : memref<512x128xf32, #tpu.memory_space<any>> -> memref<1x128xf32, #tpu.memory_space<any>>
    %c0_i32_77 = arith.constant 0 : i32
    %116 = tpu.memref_slice %arg4[%114, %c0_i32_77] : memref<8x128xf32, #tpu.memory_space<vmem>> -> memref<1x128xf32, #tpu.memory_space<vmem>>
    %117 = tpu.memref_slice %arg5[%114] : memref<8x!tpu.dma_semaphore, #tpu.memory_space<semaphore_mem>> -> memref<1x!tpu.dma_semaphore, #tpu.memory_space<semaphore_mem>>
    %118 = tpu.memref_squeeze %117 : memref<1x!tpu.dma_semaphore, #tpu.memory_space<semaphore_mem>> -> memref<!tpu.dma_semaphore, #tpu.memory_space<semaphore_mem>>
    tpu.wait_dma2 semaphore(%118 : memref<!tpu.dma_semaphore, #tpu.memory_space<semaphore_mem>>) src(%115 : memref<1x128xf32, #tpu.memory_space<any>>) dst(%116 : memref<1x128xf32, #tpu.memory_space<vmem>>)
    %c5_i32_78 = arith.constant 5 : i32
    %c1_i32_79 = arith.constant 1 : i32
    %119 = arith.muli %c5_i32_78, %c1_i32_79 : i32
    %c0_i32_80 = arith.constant 0 : i32
    %120 = arith.addi %c0_i32_80, %119 : i32
    %c0_i32_81 = arith.constant 0 : i32
    %c0_i32_82 = arith.constant 0 : i32
    %121 = tpu.memref_slice %arg2[%c0_i32_81, %c0_i32_82] : memref<512x128xf32, #tpu.memory_space<any>> -> memref<1x128xf32, #tpu.memory_space<any>>
    %c0_i32_83 = arith.constant 0 : i32
    %122 = tpu.memref_slice %arg4[%120, %c0_i32_83] : memref<8x128xf32, #tpu.memory_space<vmem>> -> memref<1x128xf32, #tpu.memory_space<vmem>>
    %123 = tpu.memref_slice %arg5[%120] : memref<8x!tpu.dma_semaphore, #tpu.memory_space<semaphore_mem>> -> memref<1x!tpu.dma_semaphore, #tpu.memory_space<semaphore_mem>>
    %124 = tpu.memref_squeeze %123 : memref<1x!tpu.dma_semaphore, #tpu.memory_space<semaphore_mem>> -> memref<!tpu.dma_semaphore, #tpu.memory_space<semaphore_mem>>
    tpu.wait_dma2 semaphore(%124 : memref<!tpu.dma_semaphore, #tpu.memory_space<semaphore_mem>>) src(%121 : memref<1x128xf32, #tpu.memory_space<any>>) dst(%122 : memref<1x128xf32, #tpu.memory_space<vmem>>)
    %c6_i32_84 = arith.constant 6 : i32
    %c1_i32_85 = arith.constant 1 : i32
    %125 = arith.muli %c6_i32_84, %c1_i32_85 : i32
    %c0_i32_86 = arith.constant 0 : i32
    %126 = arith.addi %c0_i32_86, %125 : i32
    %c0_i32_87 = arith.constant 0 : i32
    %c0_i32_88 = arith.constant 0 : i32
    %127 = tpu.memref_slice %arg2[%c0_i32_87, %c0_i32_88] : memref<512x128xf32, #tpu.memory_space<any>> -> memref<1x128xf32, #tpu.memory_space<any>>
    %c0_i32_89 = arith.constant 0 : i32
    %128 = tpu.memref_slice %arg4[%126, %c0_i32_89] : memref<8x128xf32, #tpu.memory_space<vmem>> -> memref<1x128xf32, #tpu.memory_space<vmem>>
    %129 = tpu.memref_slice %arg5[%126] : memref<8x!tpu.dma_semaphore, #tpu.memory_space<semaphore_mem>> -> memref<1x!tpu.dma_semaphore, #tpu.memory_space<semaphore_mem>>
    %130 = tpu.memref_squeeze %129 : memref<1x!tpu.dma_semaphore, #tpu.memory_space<semaphore_mem>> -> memref<!tpu.dma_semaphore, #tpu.memory_space<semaphore_mem>>
    tpu.wait_dma2 semaphore(%130 : memref<!tpu.dma_semaphore, #tpu.memory_space<semaphore_mem>>) src(%127 : memref<1x128xf32, #tpu.memory_space<any>>) dst(%128 : memref<1x128xf32, #tpu.memory_space<vmem>>)
    %c7_i32_90 = arith.constant 7 : i32
    %c1_i32_91 = arith.constant 1 : i32
    %131 = arith.muli %c7_i32_90, %c1_i32_91 : i32
    %c0_i32_92 = arith.constant 0 : i32
    %132 = arith.addi %c0_i32_92, %131 : i32
    %c0_i32_93 = arith.constant 0 : i32
    %c0_i32_94 = arith.constant 0 : i32
    %133 = tpu.memref_slice %arg2[%c0_i32_93, %c0_i32_94] : memref<512x128xf32, #tpu.memory_space<any>> -> memref<1x128xf32, #tpu.memory_space<any>>
    %c0_i32_95 = arith.constant 0 : i32
    %134 = tpu.memref_slice %arg4[%132, %c0_i32_95] : memref<8x128xf32, #tpu.memory_space<vmem>> -> memref<1x128xf32, #tpu.memory_space<vmem>>
    %135 = tpu.memref_slice %arg5[%132] : memref<8x!tpu.dma_semaphore, #tpu.memory_space<semaphore_mem>> -> memref<1x!tpu.dma_semaphore, #tpu.memory_space<semaphore_mem>>
    %136 = tpu.memref_squeeze %135 : memref<1x!tpu.dma_semaphore, #tpu.memory_space<semaphore_mem>> -> memref<!tpu.dma_semaphore, #tpu.memory_space<semaphore_mem>>
    tpu.wait_dma2 semaphore(%136 : memref<!tpu.dma_semaphore, #tpu.memory_space<semaphore_mem>>) src(%133 : memref<1x128xf32, #tpu.memory_space<any>>) dst(%134 : memref<1x128xf32, #tpu.memory_space<vmem>>)
    %c8_i32_96 = arith.constant 8 : i32
    %c0 = arith.constant 0 : index
    %c0_97 = arith.constant 0 : index
    %137 = vector.load %arg4[%c0, %c0_97] : memref<8x128xf32, #tpu.memory_space<vmem>>, vector<8x128xf32>
    %cst = arith.constant 11.3137083 : f32
    %138 = vector.broadcast %cst : f32 to vector<8x128xf32>
    %139 = arith.mulf %137, %138 : vector<8x128xf32>
    %c0_98 = arith.constant 0 : index
    %c0_99 = arith.constant 0 : index
    %140 = vector.load %arg3[%c0_98, %c0_99] : memref<8x128xf32, #tpu.memory_space<vmem>>, vector<8x128xf32>
    tpu.vector_store %arg3[%c0_98, %c0_99], %139 {strides = array<i32>} : memref<8x128xf32, #tpu.memory_space<vmem>>, vector<8x128xf32>,
    return
  }
  func.func @transform_1(%arg0: i32, %arg1: memref<16xi32, #tpu.memory_space<smem>>) -> (i32, i32) {
    %c0_i32 = arith.constant 0 : i32
    %c0_i32_0 = arith.constant 0 : i32
    return %arg0, %c0_i32 : i32, i32
  }
}

</mosaic_0001>

<llo_original>
// kernel: tpu_custom_call.1
$region0: #{tpu_custom_call.1}
  #allocation0 [shape = 'u32[]', space=smem, size = 0x4, offset = 0x4, fixed_abs, tag = 'smem constant byte address 0x4 - core index']
  #allocation1 [shape = 'u32[72,128]{1,0:T(1,128)}', space=vmem, size = 0x9000, scoped, tag = 'internal scratch']
  #allocation2 [shape = 'f32[8,128]{1,0:T(8,128)}', space=vmem, size = 0x1000, scoped, tag = 'scratch operand']
  #allocation3 [shape = 's32[8]{0}', space=sflag, size = 0x20, scoped, tag = 'scratch operand']
  #allocation4 [shape = 's32[1]{0}', space=sflag, size = 0x4, scoped, tag = 'scoped memory for tpu_custom_call.1']
  #allocation5 [shape = 'u8[512]{0}', space=smem, size = 0x200, scoped, tag = 'prefetched SMEM operand 0']
  #allocation8 [shape = 's32[]', space=sflag, size = 0x4, offset = 0, fixed_abs, tag = 'sflag constant byte address 0x0 - dummy sync flag']
  #allocation9 [shape = 's32[]', space=sflag, size = 0x4, offset = 0, fixed_abs, tag = 'sflag constant byte address 0x0 - dummy sync flag']
  #allocation10 [shape = 'u32[]', space=smem, size = 0x4, offset = 0x44, fixed_abs, tag = 'smem constant byte address 0x44 - assertion arg 0']
  #allocation11 [shape = 'u32[]', space=smem, size = 0x4, offset = 0x48, fixed_abs, tag = 'smem constant byte address 0x48 - assertion arg 1']
  #allocation12 [shape = 's32[]', space=sflag, size = 0x4, offset = 0, fixed_abs, tag = 'sflag constant byte address 0x0 - dummy sync flag']
  #allocation13 [shape = 's32[]', space=sflag, size = 0x4, offset = 0, fixed_abs, tag = 'sflag constant byte address 0x0 - dummy sync flag']
  #allocation14 [shape = 's32[]', space=sflag, size = 0x4, offset = 0, fixed_abs, tag = 'sflag constant byte address 0x0 - dummy sync flag']
  #allocation15 [shape = 's32[]', space=sflag, size = 0x4, offset = 0, fixed_abs, tag = 'sflag constant byte address 0x0 - dummy sync flag']
  #allocation16 [shape = 's32[]', space=sflag, size = 0x4, offset = 0, fixed_abs, tag = 'sflag constant byte address 0x0 - dummy sync flag']
  #allocation17 [shape = 's32[]', space=sflag, size = 0x4, offset = 0, fixed_abs, tag = 'sflag constant byte address 0x0 - dummy sync flag']
  #allocation18 [shape = 's32[]', space=sflag, size = 0x4, offset = 0, fixed_abs, tag = 'sflag constant byte address 0x0 - dummy sync flag']
  #allocation19 [shape = 's32[]', space=sflag, size = 0x4, offset = 0, fixed_abs, tag = 'sflag constant byte address 0x0 - dummy sync flag']
  #allocation20 [shape = 's32[]', space=sflag, size = 0x4, offset = 0, fixed_abs, tag = 'sflag constant byte address 0x0 - dummy sync flag']
  #allocation21 [shape = 's32[]', space=sflag, size = 0x4, offset = 0, fixed_abs, tag = 'sflag constant byte address 0x0 - dummy sync flag']
  #allocation22 [shape = 's32[]', space=sflag, size = 0x4, offset = 0, fixed_abs, tag = 'sflag constant byte address 0x0 - dummy sync flag']
  #allocation23 [shape = 's32[]', space=sflag, size = 0x4, offset = 0, fixed_abs, tag = 'sflag constant byte address 0x0 - dummy sync flag']
  #allocation24 [shape = 's32[]', space=sflag, size = 0x4, offset = 0, fixed_abs, tag = 'sflag constant byte address 0x0 - dummy sync flag']
  #allocation25 [shape = 's32[]', space=sflag, size = 0x4, offset = 0, fixed_abs, tag = 'sflag constant byte address 0x0 - dummy sync flag']
  %s0 = inlined_call_operand.hbm [shape: s32[16], index: 0, kind: input, shape index: {}]
  %s1 = inlined_call_operand.hbm [shape: f32[512,128], index: 1, kind: input, shape index: {}]
  %s2 = inlined_call_operand.hbm [shape: f32[16,128], index: 2, kind: output, shape index: {}]
  %s3 = sld [smem:[#allocation0]]
  $region57: #{tpu_custom_call.1} parent=0
    _
  %s5 = ssub.s32 1, %s3
  %s6 = scalar_select 0, %s5, %s3
  %s8 = sshll.u32 %s0, 4
  %s9 = int_to_ptr.hbm [resolvable:$true] %s8
  %11 = dma.hbm_to_smem %s9, 16, [#allocation5], [#allocation4]
  %13 = dma.done [#allocation4], 16
  %14 = sfence
  $region1: #{tpu_custom_call.1} parent=0
    #allocation6 [shape = 'u8[8192]{0}', space=vmem, size = 0x2000, scoped, tag = 'output window, operand 0']
    #allocation7 [shape = 's32[2]{0}', space=sflag, size = 0x8, scoped, tag = 'scoped memory for tpu_custom_call.1']
    %15 = vsyncpa [#allocation7], 0
    %s16 = scalar_lea.sflag [#allocation7], 1
    %17 = vsyncpa %s16, 0
    loop: start=0, step=1, limit=3
    $region2: #{tpu_custom_call.1} parent=1 // loop_pre_header
      _
    $region3: #{tpu_custom_call.1} parent=1 // loop_header
      %s19 = sphi 0, %s23
      %p20 = scmp.ge.s32.totalorder %s19, 3
      %s28 = sphi 0, %s30
      %s31 = sphi 0, %s28
      %s41 = sphi 0, %s31
    $region4: #{tpu_custom_call.1} parent=1 // loop_header_branch
      %22 = sbr.rel (%p20) target = $region8
    $region5: #{tpu_custom_call.1} parent=1 // loop_body
      %s24 = ssub.s32 %s19, 1
      %s25 = sadd.s32 %s19, 1
      %s26 = ssub.s32 %s19, %s25
      %p27 = scmp.eq.s32.totalorder %s26, 0
      %s29 = sadd.s32 %s28, 1
      %s30 = scalar_select %p27, %s28, %s29
      %p32 = pneg %p27
      %p33 = scmp.eq.s32.totalorder %s19, 1
      %p34 = por %p32, %p33
      %p35 = scmp.ne.s32.totalorder %s28, %s31
      %p36 = scmp.eq.s32.totalorder %s19, 0
      %p37 = por %p35, %p36
      %p38 = scmp.ne.s32.totalorder %s28, %s31
      %p39 = scmp.eq.s32.totalorder %s24, 1
      %p40 = por %p38, %p39
      %p42 = scmp.ne.s32.totalorder %s31, %s41
      %p43 = scmp.eq.s32.totalorder %s24, 0
      %p44 = por %p42, %p43
      %p45 = scmp.lt.s32.totalorder %s19, 2
      // Predicated region
      $region9: #{tpu_custom_call.1} parent=5 // pred_check
        %p46 = pneg %p45
      $region10: #{tpu_custom_call.1} parent=5 // pred_check_branch
        %48 = sbr.rel (%p46) target = $region12
      $region11: #{tpu_custom_call.1} parent=5 // pred_region
        %p49 = pneg %p37
        %p50 = pneg %p34
        %s51 = sand.u32 %s28, 1
        %s52 = scalar_lea.sflag [#allocation7], %s51
        %s53 = sand.u32 %s28, 1
        %s54 = smul.addr %s53, 8
        %s55 = scalar_lea.vmem [#allocation6], %s54
        %s56 = smul.u32 %s19, 8
        %s57 = sld [smem:[#allocation5 + %s56]]
        %p58 = scmp.gt.s32.totalorder %s57, 0
        %s59 = scalar_select %p58, %s57, 0
        %p60 = scmp.lt.s32.totalorder %s59, 511
        %s61 = scalar_select %p60, %s59, 511
        %s62 = scalar_lea.hbm %s1, %s61
        // Predicated region
        $region13: #{tpu_custom_call.1} parent=11 // pred_check
          _
        $region14: #{tpu_custom_call.1} parent=11 // pred_check_branch
          %64 = sbr.rel target = $region16
        $region15: #{tpu_custom_call.1} parent=11 // pred_region
          %65 = sst [smem:[#allocation10]] [#allocation9]
          %66 = sst [smem:[#allocation11]] [#allocation8]
        $region16: #{tpu_custom_call.1} parent=11 // pred_fallthru
          _
        %68 = shalt.err (0)
        %s70 = sshll.u32 %s62, 4
        %s71 = int_to_ptr.hbm [resolvable:$true] %s70
        %s72 = sshll.u32 [#allocation2], 4
        %s73 = int_to_ptr.vmem [resolvable:$true] %s72
        %75 = dma.hbm_to_vmem [thread:$0]  %s71, 16, %s73, [#allocation3]
        %s76 = sadd.s32 %s56, 1
        %s77 = sld [smem:[#allocation5 + %s76]]
        %p78 = scmp.gt.s32.totalorder %s77, 0
        %s79 = scalar_select %p78, %s77, 0
        %p80 = scmp.lt.s32.totalorder %s79, 511
        %s81 = scalar_select %p80, %s79, 511
        %s82 = scalar_lea.hbm %s1, %s81
        %s83 = scalar_lea.vmem [#allocation2], 1
        %s84 = scalar_lea.sflag [#allocation3], 1
        // Predicated region
        $region17: #{tpu_custom_call.1} parent=11 // pred_check
          _
        $region18: #{tpu_custom_call.1} parent=11 // pred_check_branch
          %86 = sbr.rel target = $region20
        $region19: #{tpu_custom_call.1} parent=11 // pred_region
          %87 = sst [smem:[#allocation10]] [#allocation13]
          %88 = sst [smem:[#allocation11]] [#allocation12]
        $region20: #{tpu_custom_call.1} parent=11 // pred_fallthru
          _
        %90 = shalt.err (0)
        %s92 = sshll.u32 %s82, 4
        %s93 = int_to_ptr.hbm [resolvable:$true] %s92
        %s94 = sshll.u32 %s83, 4
        %s95 = int_to_ptr.vmem [resolvable:$true] %s94
        %97 = dma.hbm_to_vmem [thread:$0]  %s93, 16, %s95, %s84
        %s98 = sadd.s32 %s56, 2
        %s99 = sld [smem:[#allocation5 + %s98]]
        %p100 = scmp.gt.s32.totalorder %s99, 0
        %s101 = scalar_select %p100, %s99, 0
        %p102 = scmp.lt.s32.totalorder %s101, 511
        %s103 = scalar_select %p102, %s101, 511
        %s104 = scalar_lea.hbm %s1, %s103
        %s105 = scalar_lea.vmem [#allocation2], 2
        %s106 = scalar_lea.sflag [#allocation3], 2
        // Predicated region
        $region21: #{tpu_custom_call.1} parent=11 // pred_check
          _
        $region22: #{tpu_custom_call.1} parent=11 // pred_check_branch
          %108 = sbr.rel target = $region24
        $region23: #{tpu_custom_call.1} parent=11 // pred_region
          %109 = sst [smem:[#allocation10]] [#allocation15]
          %110 = sst [smem:[#allocation11]] [#allocation14]
        $region24: #{tpu_custom_call.1} parent=11 // pred_fallthru
          _
        %112 = shalt.err (0)
        %s114 = sshll.u32 %s104, 4
        %s115 = int_to_ptr.hbm [resolvable:$true] %s114
        %s116 = sshll.u32 %s105, 4
        %s117 = int_to_ptr.vmem [resolvable:$true] %s116
        %119 = dma.hbm_to_vmem [thread:$0]  %s115, 16, %s117, %s106
        %s120 = sadd.s32 %s56, 3
        %s121 = sld [smem:[#allocation5 + %s120]]
        %p122 = scmp.gt.s32.totalorder %s121, 0
        %s123 = scalar_select %p122, %s121, 0
        %p124 = scmp.lt.s32.totalorder %s123, 511
        %s125 = scalar_select %p124, %s123, 511
        %s126 = scalar_lea.hbm %s1, %s125
        %s127 = scalar_lea.vmem [#allocation2], 3
        %s128 = scalar_lea.sflag [#allocation3], 3
        // Predicated region
        $region25: #{tpu_custom_call.1} parent=11 // pred_check
          _
        $region26: #{tpu_custom_call.1} parent=11 // pred_check_branch
          %130 = sbr.rel target = $region28
        $region27: #{tpu_custom_call.1} parent=11 // pred_region
          %131 = sst [smem:[#allocation10]] [#allocation17]
          %132 = sst [smem:[#allocation11]] [#allocation16]
        $region28: #{tpu_custom_call.1} parent=11 // pred_fallthru
          _
        %134 = shalt.err (0)
        %s136 = sshll.u32 %s126, 4
        %s137 = int_to_ptr.hbm [resolvable:$true] %s136
        %s138 = sshll.u32 %s127, 4
        %s139 = int_to_ptr.vmem [resolvable:$true] %s138
        %141 = dma.hbm_to_vmem [thread:$0]  %s137, 16, %s139, %s128
        %s142 = sadd.s32 %s56, 4
        %s143 = sld [smem:[#allocation5 + %s142]]
        %p144 = scmp.gt.s32.totalorder %s143, 0
        %s145 = scalar_select %p144, %s143, 0
        %p146 = scmp.lt.s32.totalorder %s145, 511
        %s147 = scalar_select %p146, %s145, 511
        %s148 = scalar_lea.hbm %s1, %s147
        %s149 = scalar_lea.vmem [#allocation2], 4
        %s150 = scalar_lea.sflag [#allocation3], 4
        // Predicated region
        $region29: #{tpu_custom_call.1} parent=11 // pred_check
          _
        $region30: #{tpu_custom_call.1} parent=11 // pred_check_branch
          %152 = sbr.rel target = $region32
        $region31: #{tpu_custom_call.1} parent=11 // pred_region
          %153 = sst [smem:[#allocation10]] [#allocation19]
          %154 = sst [smem:[#allocation11]] [#allocation18]
        $region32: #{tpu_custom_call.1} parent=11 // pred_fallthru
          _
        %156 = shalt.err (0)
        %s158 = sshll.u32 %s148, 4
        %s159 = int_to_ptr.hbm [resolvable:$true] %s158
        %s160 = sshll.u32 %s149, 4
        %s161 = int_to_ptr.vmem [resolvable:$true] %s160
        %163 = dma.hbm_to_vmem [thread:$0]  %s159, 16, %s161, %s150
        %s164 = sadd.s32 %s56, 5
        %s165 = sld [smem:[#allocation5 + %s164]]
        %p166 = scmp.gt.s32.totalorder %s165, 0
        %s167 = scalar_select %p166, %s165, 0
        %p168 = scmp.lt.s32.totalorder %s167, 511
        %s169 = scalar_select %p168, %s167, 511
        %s170 = scalar_lea.hbm %s1, %s169
        %s171 = scalar_lea.vmem [#allocation2], 5
        %s172 = scalar_lea.sflag [#allocation3], 5
        // Predicated region
        $region33: #{tpu_custom_call.1} parent=11 // pred_check
          _
        $region34: #{tpu_custom_call.1} parent=11 // pred_check_branch
          %174 = sbr.rel target = $region36
        $region35: #{tpu_custom_call.1} parent=11 // pred_region
          %175 = sst [smem:[#allocation10]] [#allocation21]
          %176 = sst [smem:[#allocation11]] [#allocation20]
        $region36: #{tpu_custom_call.1} parent=11 // pred_fallthru
          _
        %178 = shalt.err (0)
        %s180 = sshll.u32 %s170, 4
        %s181 = int_to_ptr.hbm [resolvable:$true] %s180
        %s182 = sshll.u32 %s171, 4
        %s183 = int_to_ptr.vmem [resolvable:$true] %s182
        %185 = dma.hbm_to_vmem [thread:$0]  %s181, 16, %s183, %s172
        %s186 = sadd.s32 %s56, 6
        %s187 = sld [smem:[#allocation5 + %s186]]
        %p188 = scmp.gt.s32.totalorder %s187, 0
        %s189 = scalar_select %p188, %s187, 0
        %p190 = scmp.lt.s32.totalorder %s189, 511
        %s191 = scalar_select %p190, %s189, 511
        %s192 = scalar_lea.hbm %s1, %s191
        %s193 = scalar_lea.vmem [#allocation2], 6
        %s194 = scalar_lea.sflag [#allocation3], 6
        // Predicated region
        $region37: #{tpu_custom_call.1} parent=11 // pred_check
          _
        $region38: #{tpu_custom_call.1} parent=11 // pred_check_branch
          %196 = sbr.rel target = $region40
        $region39: #{tpu_custom_call.1} parent=11 // pred_region
          %197 = sst [smem:[#allocation10]] [#allocation23]
          %198 = sst [smem:[#allocation11]] [#allocation22]
        $region40: #{tpu_custom_call.1} parent=11 // pred_fallthru
          _
        %200 = shalt.err (0)
        %s202 = sshll.u32 %s192, 4
        %s203 = int_to_ptr.hbm [resolvable:$true] %s202
        %s204 = sshll.u32 %s193, 4
        %s205 = int_to_ptr.vmem [resolvable:$true] %s204
        %207 = dma.hbm_to_vmem [thread:$0]  %s203, 16, %s205, %s194
        %s208 = sadd.s32 %s56, 7
        %s209 = sld [smem:[#allocation5 + %s208]]
        %p210 = scmp.gt.s32.totalorder %s209, 0
        %s211 = scalar_select %p210, %s209, 0
        %p212 = scmp.lt.s32.totalorder %s211, 511
        %s213 = scalar_select %p212, %s211, 511
        %s214 = scalar_lea.hbm %s1, %s213
        %s215 = scalar_lea.vmem [#allocation2], 7
        %s216 = scalar_lea.sflag [#allocation3], 7
        // Predicated region
        $region41: #{tpu_custom_call.1} parent=11 // pred_check
          _
        $region42: #{tpu_custom_call.1} parent=11 // pred_check_branch
          %218 = sbr.rel target = $region44
        $region43: #{tpu_custom_call.1} parent=11 // pred_region
          %219 = sst [smem:[#allocation10]] [#allocation25]
          %220 = sst [smem:[#allocation11]] [#allocation24]
        $region44: #{tpu_custom_call.1} parent=11 // pred_fallthru
          _
        %222 = shalt.err (0)
        %s224 = sshll.u32 %s214, 4
        %s225 = int_to_ptr.hbm [resolvable:$true] %s224
        %s226 = sshll.u32 %s215, 4
        %s227 = int_to_ptr.vmem [resolvable:$true] %s226
        %229 = dma.hbm_to_vmem [thread:$0]  %s225, 16, %s227, %s216
        %s230 = smul.u32 1, 1
        %s231 = sshll.u32 %s230, 4
        %232 = dma.done [#allocation3], %s231
        %s233 = sshll.u32 %s230, 4
        %234 = dma.done %s84, %s233
        %s235 = sshll.u32 %s230, 4
        %236 = dma.done %s106, %s235
        %s237 = sshll.u32 %s230, 4
        %238 = dma.done %s128, %s237
        %s239 = sshll.u32 %s230, 4
        %240 = dma.done %s150, %s239
        %s241 = sshll.u32 %s230, 4
        %242 = dma.done %s172, %s241
        %s243 = sshll.u32 %s230, 4
        %244 = dma.done %s194, %s243
        %s245 = sshll.u32 %s230, 4
        %246 = dma.done %s216, %s245
        %v247 = vld [vmem:[#allocation2] sm:$0xff]
        %v248 = vmul.f32 %v247, 11.313708
        %249 = vst [vmem:[%s55] sm:$0xff] %v248
        %s250 = sand.u32 %s28, 1
        %s251 = scalar_lea.sflag [#allocation7], %s250
        %s252 = sand.u32 %s28, 1
        %s253 = smul.addr %s252, 8
        %s254 = scalar_lea.vmem [#allocation6], %s253
        // Predicated region
        $region45: #{tpu_custom_call.1} parent=11 // pred_check
          %p255 = pneg %p34
        $region46: #{tpu_custom_call.1} parent=11 // pred_check_branch
          %257 = sbr.rel (%p255) target = $region48
        $region47: #{tpu_custom_call.1} parent=11 // pred_region
          %259 = vsyncadd %s251, 0
          %s260 = smul.addr %s19, 8
          %s261 = scalar_lea.hbm %s2, %s260
          %s263 = sshll.u32 %s254, 4
          %s264 = int_to_ptr.vmem [resolvable:$true] %s263
          %s265 = sshll.u32 %s261, 4
          %s266 = int_to_ptr.hbm [resolvable:$true] %s265
          %268 = dma.vmem_to_hbm [thread:$0]  %s264, 128, %s266, %s251
        $region48: #{tpu_custom_call.1} parent=11 // pred_fallthru
          _
      $region12: #{tpu_custom_call.1} parent=5 // pred_fallthru
        _
      %p269 = scmp.le.s32.totalorder 1, %s19
      // Predicated region
      $region49: #{tpu_custom_call.1} parent=5 // pred_check
        %p270 = pneg %p269
      $region50: #{tpu_custom_call.1} parent=5 // pred_check_branch
        %272 = sbr.rel (%p270) target = $region52
      $region51: #{tpu_custom_call.1} parent=5 // pred_region
        %s273 = ssub.s32 %s19, 1
        // Predicated region
        $region53: #{tpu_custom_call.1} parent=51 // pred_check
          %p274 = pneg %p40
        $region54: #{tpu_custom_call.1} parent=51 // pred_check_branch
          %276 = sbr.rel (%p274) target = $region56
        $region55: #{tpu_custom_call.1} parent=51 // pred_region
          %s277 = sand.u32 %s31, 1
          %s278 = scalar_lea.sflag [#allocation7], %s277
          %s279 = sand.u32 %s31, 1
          %s280 = smul.addr %s279, 8
          %s281 = scalar_lea.vmem [#allocation6], %s280
          %283 = dma.done %s278, 128
        $region56: #{tpu_custom_call.1} parent=51 // pred_fallthru
          _
      $region52: #{tpu_custom_call.1} parent=5 // pred_fallthru
        _
    $region6: #{tpu_custom_call.1} parent=1 // loop_footer
      %s23 = sadd.s32 1, %s19
    $region7: #{tpu_custom_call.1} parent=1 // loop_footer_branch
      %18 = sbr.rel target = $region3
    $region8: #{tpu_custom_call.1} parent=1 // loop_exit
      _
    %284 = vsyncpa [#allocation7], 1
    %s285 = scalar_lea.sflag [#allocation7], 1
    %286 = vsyncpa %s285, 1
  %287 = vsyncmov [#allocation3]
  %s288 = vpop.sfrf %287
  %p289 = scmp.eq.s32.totalorder %s288, 0
  %p290 = pneg %p289
  %292 = shalt.err (%p290)
  %s293 = scalar_lea.sflag [#allocation3], 1
  %294 = vsyncmov %s293
  %s295 = vpop.sfrf %294
  %p296 = scmp.eq.s32.totalorder %s295, 0
  %p297 = pneg %p296
  %299 = shalt.err (%p297)
  %s300 = scalar_lea.sflag [#allocation3], 2
  %301 = vsyncmov %s300
  %s302 = vpop.sfrf %301
  %p303 = scmp.eq.s32.totalorder %s302, 0
  %p304 = pneg %p303
  %306 = shalt.err (%p304)
  %s307 = scalar_lea.sflag [#allocation3], 3
  %308 = vsyncmov %s307
  %s309 = vpop.sfrf %308
  %p310 = scmp.eq.s32.totalorder %s309, 0
  %p311 = pneg %p310
  %313 = shalt.err (%p311)
  %s314 = scalar_lea.sflag [#allocation3], 4
  %315 = vsyncmov %s314
  %s316 = vpop.sfrf %315
  %p317 = scmp.eq.s32.totalorder %s316, 0
  %p318 = pneg %p317
  %320 = shalt.err (%p318)
  %s321 = scalar_lea.sflag [#allocation3], 5
  %322 = vsyncmov %s321
  %s323 = vpop.sfrf %322
  %p324 = scmp.eq.s32.totalorder %s323, 0
  %p325 = pneg %p324
  %327 = shalt.err (%p325)
  %s328 = scalar_lea.sflag [#allocation3], 6
  %329 = vsyncmov %s328
  %s330 = vpop.sfrf %329
  %p331 = scmp.eq.s32.totalorder %s330, 0
  %p332 = pneg %p331
  %334 = shalt.err (%p332)
  %s335 = scalar_lea.sflag [#allocation3], 7
  %336 = vsyncmov %s335
  %s337 = vpop.sfrf %336
  %p338 = scmp.eq.s32.totalorder %s337, 0
  %p339 = pneg %p338
  %341 = shalt.err (%p339)

</llo_original>
